<compile_context>
chip_gen: v6e
topology: v6e:2x2x1
jax: 0.10.0
libtpu: 0.0.40
codegen_flags: <defaults>
</compile_context>

<pallas_src>
import jax
import jax.numpy as jnp
from jax.experimental import pallas as pl
from jax.experimental.pallas import tpu as pltpu


def _round_up(x, m):
    return ((x + m - 1) // m) * m


def _discriminator2_kernel(hidden_ref, w_ref, b_ref, out_ref, acc_ref):
    # hidden_ref: (TB, TS, E_pad) bf16/f32 tile
    # w_ref:      (E_pad, C_pad)  f32  (zero-padded columns)
    # b_ref:      (1, C_pad)      f32  (padded entries = -1e30)
    # out_ref:    (TB, C_pad)     f32  log-probs (padded cols ~ -inf)
    # acc_ref:    (TB, E_pad)     f32  sequence-sum accumulator (scratch)
    s = pl.program_id(1)

    @pl.when(s == 0)
    def _init():
        acc_ref[...] = jnp.zeros_like(acc_ref)

    # Streamed sequence-sum: only a (TB, TS, E_pad) tile is live at a time;
    # accumulation is f32 regardless of the (bf16) input dtype.
    acc_ref[...] += jnp.sum(hidden_ref[...].astype(jnp.float32), axis=1)

    @pl.when(s == pl.num_programs(1) - 1)
    def _finalize():
        pooled = acc_ref[...]                                   # (TB, E_pad) f32
        logits = jnp.dot(pooled, w_ref[...],
                         preferred_element_type=jnp.float32)     # (TB, C_pad) MXU
        logits = logits + b_ref[...]                             # padded cols -> -1e30

        # Numerically stable log_softmax; padded columns contribute exp(...) ~ 0.
        m = jnp.max(logits, axis=-1, keepdims=True)
        shifted = logits - m
        lse = jnp.log(jnp.sum(jnp.exp(shifted), axis=-1, keepdims=True))
        out_ref[...] = shifted - lse


def discriminator2_forward(hidden, w, b, *, tb_cap=8, ts_cap=256):
    """hidden: (B, S, E) f32/bf16, w: (E, C) f32, b: (C,) f32 -> (B, C) log-probs."""
    B, S, E = hidden.shape
    Ew, C = w.shape
    assert Ew == E, (Ew, E)

    # Lane-dense padding of the embed (lane) and class (lane) dims.
    E_pad = _round_up(E, 128)
    C_pad = _round_up(max(C, 128), 128)

    TB = min(tb_cap, B)
    TS = min(ts_cap, S)
    Bp = _round_up(B, TB)
    Sp = _round_up(S, TS)

    # bf16 hidden halves HBM traffic / VMEM footprint; accumulation stays f32.
    hidden = hidden.astype(jnp.bfloat16)
    # Zero-padded batch rows / sequence rows / embed cols contribute nothing to
    # the sequence-sum or the matmul, so semantics are preserved.
    hidden_p = jnp.pad(hidden, ((0, Bp - B), (0, Sp - S), (0, E_pad - E)))
    w_p = jnp.pad(w.astype(jnp.float32), ((0, E_pad - E), (0, C_pad - C)))
    # Padded classes get a very negative bias -> ~0 probability under softmax.
    b_p = jnp.pad(b.astype(jnp.float32).reshape(1, C),
                  ((0, 0), (0, C_pad - C)), constant_values=-1e30)

    grid = (Bp // TB, Sp // TS)

    itemsize = jnp.dtype(hidden_p.dtype).itemsize
    tile_bytes = TB * TS * E_pad * itemsize
    vmem_needed = (2 * tile_bytes              # double-buffered hidden tile
                   + 2 * E_pad * C_pad * 4     # weight
                   + 2 * C_pad * 4             # bias
                   + 2 * TB * C_pad * 4        # output block
                   + TB * E_pad * 4)           # f32 accumulator scratch
    vmem_limit = int(min(max(2 * vmem_needed, 32 << 20), 64 << 20))

    cost = pl.CostEstimate(
        flops=2 * Bp * Sp * E_pad + 2 * Bp * E_pad * C_pad,
        transcendentals=Bp * C_pad,
        bytes_accessed=(hidden_p.size * itemsize
                        + w_p.size * 4 + b_p.size * 4 + Bp * C_pad * 4),
    )

    out_padded = pl.pallas_call(
        _discriminator2_kernel,
        out_shape=jax.ShapeDtypeStruct((Bp, C_pad), jnp.float32),
        grid_spec=pltpu.PrefetchScalarGridSpec(
            num_scalar_prefetch=0,
            grid=grid,
            in_specs=[
                pl.BlockSpec((TB, TS, E_pad), lambda bi, si: (bi, si, 0)),
                pl.BlockSpec((E_pad, C_pad), lambda bi, si: (0, 0)),
                pl.BlockSpec((1, C_pad), lambda bi, si: (0, 0)),
            ],
            out_specs=pl.BlockSpec((TB, C_pad), lambda bi, si: (bi, 0)),
            scratch_shapes=[pltpu.VMEM((TB, E_pad), jnp.float32)],
        ),
        compiler_params=pltpu.CompilerParams(
            dimension_semantics=("parallel", "arbitrary"),
            vmem_limit_bytes=vmem_limit,
        ),
        cost_estimate=cost,
    )(hidden_p, w_p, b_p)

    return out_padded[:B, :C]


def reference_forward(hidden, w, b):
    pooled = jnp.sum(hidden.astype(jnp.float32), axis=1)
    logits = pooled @ w + b
    return jax.nn.log_softmax(logits, axis=-1)


if __name__ == "__main__":
    # Small shapes consistent with the module: ESIZE (embed) scaled down to 32,
    # class_size=5 as in Discriminator2's default.
    B, S, E, C, V = 2, 8, 32, 5, 64

    key = jax.random.PRNGKey(0)
    k_tok, k_emb, k_w, k_b = jax.random.split(key, 4)

    # Glue: deterministic token ids + embedding table (model.forward_embed
    # stand-in).  The pretrained T5 transformer stack is stubbed (see TODO).
    token_ids = jax.random.randint(k_tok, (B, S), 0, V)
    embed_table = jax.random.normal(k_emb, (V, E), dtype=jnp.float32) * 0.02
    hidden = embed_table[token_ids]                 # (B, S, E) f32

    # ClassificationHead parameters (Linear(embed_size -> class_size)),
    # deterministically initialized.  Weight stored as (E, C) so the kernel
    # matmul is pooled(B,E) @ W(E,C).
    w = jax.random.normal(k_w, (E, C), dtype=jnp.float32) * 0.1
    b = jax.random.normal(k_b, (C,), dtype=jnp.float32) * 0.1

    out = discriminator2_forward(hidden, w, b)
    out = jax.block_until_ready(out)

    # Reference under the same bf16 hidden-state quantization the kernel uses.
    ref = reference_forward(hidden.astype(jnp.bfloat16), w, b)
    assert out.shape == (B, C), out.shape
    assert jnp.allclose(out, ref, atol=1e-4, rtol=1e-4), (out, ref)

    print("KERNEL_OK")
</pallas_src>

<mosaic_0001>
module attributes {stable_mosaic.version = 11 : i64} {
  func.func @_discriminator2_kernel(%arg0: i32, %arg1: i32, %arg2: memref<2x8x128xbf16, #tpu.memory_space<vmem>>, %arg3: memref<128x128xf32, #tpu.memory_space<vmem>>, %arg4: memref<1x128xf32, #tpu.memory_space<vmem>>, %arg5: memref<2x128xf32, #tpu.memory_space<vmem>>, %arg6: memref<2x128xf32, #tpu.memory_space<vmem>>) attributes {dimension_semantics = [#tpu.dimension_semantics<parallel>, #tpu.dimension_semantics<arbitrary>], iteration_bounds = array<i64: 1, 1>, scalar_prefetch = 0 : i64, scratch_operands = 1 : i64, tpu.core_type = #tpu.core_type<tc>, window_params = [{transform_indices = @transform_0, window_bounds = array<i64: 2, 8, 128>}, {pipeline_mode = #tpu.pipeline_mode<synchronous>, transform_indices = @transform_1, window_bounds = array<i64: 128, 128>}, {pipeline_mode = #tpu.pipeline_mode<synchronous>, transform_indices = @transform_2, window_bounds = array<i64: 1, 128>}, {transform_indices = @transform_3, window_bounds = array<i64: 2, 128>}]} {
    %c0_i32 = arith.constant 0 : i32
    %0 = arith.cmpi eq, %arg1, %c0_i32 : i32
    %1 = arith.extui %0 : i1 to i32
    %c0_i32_0 = arith.constant 0 : i32
    %2 = arith.cmpi ne, %1, %c0_i32_0 : i32
    scf.if %2 {
      %cst_9 = arith.constant 0.000000e+00 : f32
      %12 = vector.broadcast %cst_9 : f32 to vector<2x128xf32>
      %c0_10 = arith.constant 0 : index
      %c0_11 = arith.constant 0 : index
      %13 = vector.load %arg6[%c0_10, %c0_11] : memref<2x128xf32, #tpu.memory_space<vmem>>, vector<2x128xf32>
      tpu.vector_store %arg6[%c0_10, %c0_11], %12 {strides = array<i32>} : memref<2x128xf32, #tpu.memory_space<vmem>>, vector<2x128xf32>,
    } else {
    }
    %c0 = arith.constant 0 : index
    %c0_1 = arith.constant 0 : index
    %3 = vector.load %arg6[%c0, %c0_1] : memref<2x128xf32, #tpu.memory_space<vmem>>, vector<2x128xf32>
    %c0_2 = arith.constant 0 : index
    %c0_3 = arith.constant 0 : index
    %c0_4 = arith.constant 0 : index
    %4 = vector.load %arg2[%c0_2, %c0_3, %c0_4] : memref<2x8x128xbf16, #tpu.memory_space<vmem>>, vector<2x8x128xbf16>
    %5 = arith.extf %4 : vector<2x8x128xbf16> to vector<2x8x128xf32>
    %cst = arith.constant dense<0.000000e+00> : vector<2x128xf32>
    %6 = vector.multi_reduction <add>, %5, %cst [1] : vector<2x8x128xf32> to vector<2x128xf32>
    %7 = arith.addf %3, %6 : vector<2x128xf32>
    %c0_5 = arith.constant 0 : index
    %c0_6 = arith.constant 0 : index
    %8 = vector.load %arg6[%c0_5, %c0_6] : memref<2x128xf32, #tpu.memory_space<vmem>>, vector<2x128xf32>
    tpu.vector_store %arg6[%c0_5, %c0_6], %7 {strides = array<i32>} : memref<2x128xf32, #tpu.memory_space<vmem>>, vector<2x128xf32>,
    %c0_i32_7 = arith.constant 0 : i32
    %9 = arith.cmpi eq, %arg1, %c0_i32_7 : i32
    %10 = arith.extui %9 : i1 to i32
    %c0_i32_8 = arith.constant 0 : i32
    %11 = arith.cmpi ne, %10, %c0_i32_8 : i32
    scf.if %11 {
      %c0_9 = arith.constant 0 : index
      %c0_10 = arith.constant 0 : index
      %12 = vector.load %arg6[%c0_9, %c0_10] : memref<2x128xf32, #tpu.memory_space<vmem>>, vector<2x128xf32>
      %c0_11 = arith.constant 0 : index
      %c0_12 = arith.constant 0 : index
      %13 = vector.load %arg3[%c0_11, %c0_12] : memref<128x128xf32, #tpu.memory_space<vmem>>, vector<128x128xf32>
      %cst_13 = arith.constant dense<0.000000e+00> : vector<2x128xf32>
      %14 = tpu.matmul %12, %13, %cst_13 {dimension_numbers = #tpu.dot_dimension_numbers<[1], [0], [0], [1], [0, 0, 1, 1], [], []>} : vector<2x128xf32>, vector<128x128xf32>, vector<2x128xf32> -> vector<2x128xf32>
      %c0_14 = arith.constant 0 : index
      %c0_15 = arith.constant 0 : index
      %15 = vector.load %arg4[%c0_14, %c0_15] : memref<1x128xf32, #tpu.memory_space<vmem>>, vector<1x128xf32>
      %16 = vector.broadcast %15 : vector<1x128xf32> to vector<2x128xf32>
      %17 = arith.addf %14, %16 : vector<2x128xf32>
      %cst_16 = arith.constant dense<0xFF800000> : vector<2xf32>
      %18 = vector.multi_reduction <maximumf>, %17, %cst_16 [1] : vector<2x128xf32> to vector<2xf32>
      %19 = vector.shape_cast %18 : vector<2xf32> to vector<2x1xf32>
      %20 = vector.broadcast %19 : vector<2x1xf32> to vector<2x128xf32>
      %21 = arith.subf %17, %20 : vector<2x128xf32>
      %22 = math.exp %21 : vector<2x128xf32>
      %cst_17 = arith.constant dense<0.000000e+00> : vector<2xf32>
      %23 = vector.multi_reduction <add>, %22, %cst_17 [1] : vector<2x128xf32> to vector<2xf32>
      %24 = vector.shape_cast %23 : vector<2xf32> to vector<2x1xf32>
      %25 = math.log %24 : vector<2x1xf32>
      %26 = vector.broadcast %25 : vector<2x1xf32> to vector<2x128xf32>
      %27 = arith.subf %21, %26 : vector<2x128xf32>
      %c0_18 = arith.constant 0 : index
      %c0_19 = arith.constant 0 : index
      %28 = vector.load %arg5[%c0_18, %c0_19] : memref<2x128xf32, #tpu.memory_space<vmem>>, vector<2x128xf32>
      tpu.vector_store %arg5[%c0_18, %c0_19], %27 {strides = array<i32>} : memref<2x128xf32, #tpu.memory_space<vmem>>, vector<2x128xf32>,
    } else {
    }
    return
  }
  func.func @transform_0(%arg0: i32, %arg1: i32) -> (i32, i32, i32) {
    %c0_i32 = arith.constant 0 : i32
    %c0_i32_0 = arith.constant 0 : i32
    return %arg0, %arg1, %c0_i32 : i32, i32, i32
  }
  func.func @transform_1(%arg0: i32, %arg1: i32) -> (i32, i32) {
    %c0_i32 = arith.constant 0 : i32
    %c0_i32_0 = arith.constant 0 : i32
    %c0_i32_1 = arith.constant 0 : i32
    return %c0_i32, %c0_i32_0 : i32, i32
  }
  func.func @transform_2(%arg0: i32, %arg1: i32) -> (i32, i32) {
    %c0_i32 = arith.constant 0 : i32
    %c0_i32_0 = arith.constant 0 : i32
    %c0_i32_1 = arith.constant 0 : i32
    return %c0_i32, %c0_i32_0 : i32, i32
  }
  func.func @transform_3(%arg0: i32, %arg1: i32) -> (i32, i32) {
    %c0_i32 = arith.constant 0 : i32
    %c0_i32_0 = arith.constant 0 : i32
    return %arg0, %c0_i32 : i32, i32
  }
}

</mosaic_0001>

<llo_original>
// kernel: tpu_custom_call.1
$region0: #{tpu_custom_call.1}
  #allocation0 [shape = 'u32[]', space=smem, size = 0x4, offset = 0x4, fixed_abs, tag = 'smem constant byte address 0x4 - core index']
  #allocation1 [shape = 'u32[144,128]{1,0:T(1,128)}', space=vmem, size = 0x12000, scoped, tag = 'internal scratch']
  #allocation2 [shape = 'f32[2,128]{1,0:T(2,128)}', space=vmem, size = 0x400, scoped, tag = 'scratch operand']
  %s0 = inlined_call_operand.hbm [shape: bf16[2,8,128], index: 0, kind: input, shape index: {}]
  %s1 = inlined_call_operand.hbm [shape: f32[128,128], index: 1, kind: input, shape index: {}]
  %s2 = inlined_call_operand.vmem [shape: f32[1,128], index: 2, kind: input, shape index: {}]
  %s3 = inlined_call_operand.hbm [shape: f32[2,128], index: 3, kind: output, shape index: {}]
  %s4 = sld [smem:[#allocation0]]
  $region38: #{tpu_custom_call.1} parent=0
    _
  %s6 = ssub.s32 1, %s4
  %s7 = scalar_select 0, %s6, %s4
  $region1: #{tpu_custom_call.1} parent=0
    #allocation3 [shape = 'u8[4096]{0}', space=vmem, size = 0x1000, scoped, tag = 'input window, operand 0, single buffered']
    #allocation4 [shape = 's32[1]{0}', space=sflag, size = 0x4, scoped, tag = 'scoped memory for tpu_custom_call.1']
    #allocation5 [shape = 's32[1]{0}', space=sflag, size = 0x4, scoped, tag = 'scoped memory for tpu_custom_call.1']
    #allocation6 [shape = 'u8[65536]{0}', space=vmem, size = 0x10000, scoped, tag = 'input window, operand 1, single buffered']
    #allocation7 [shape = 's32[1]{0}', space=sflag, size = 0x4, scoped, tag = 'scoped memory for tpu_custom_call.1']
    #allocation8 [shape = 'u8[1024]{0}', space=vmem, size = 0x400, scoped, tag = 'output window, operand 0, single buffered']
    %8 = vsyncpa [#allocation4], 0
    %9 = vsyncpa [#allocation7], 0
    %10 = vsyncpa [#allocation5], 0
    // Predicated region
    $region2: #{tpu_custom_call.1} parent=1 // pred_check
      _
    $region3: #{tpu_custom_call.1} parent=1 // pred_check_branch
      %12 = sbr.rel (0) target = $region5
    $region4: #{tpu_custom_call.1} parent=1 // pred_region
      %s14 = ssub.s32 128, 128
      %15 = vsyncadd [#allocation4], %s14
      %s16 = sshll.u32 [#allocation3], 4
      %s17 = int_to_ptr.vmem [resolvable:$true] %s16
      %22 = dma.hbm_to_vmem [thread:$0]  %s0, 128, %s17, [#allocation4], 64, 64, 4
    $region5: #{tpu_custom_call.1} parent=1 // pred_fallthru
      _
    // Predicated region
    $region6: #{tpu_custom_call.1} parent=1 // pred_check
      _
    $region7: #{tpu_custom_call.1} parent=1 // pred_check_branch
      %24 = sbr.rel (0) target = $region9
    $region8: #{tpu_custom_call.1} parent=1 // pred_region
      %s26 = ssub.s32 2048, 2048
      %27 = vsyncadd [#allocation7], %s26
      %s28 = sshll.u32 [#allocation6], 4
      %s29 = int_to_ptr.vmem [resolvable:$true] %s28
      %34 = dma.hbm_to_vmem [thread:$0]  %s1, 2048, %s29, [#allocation7], 128, 128, 8
    $region9: #{tpu_custom_call.1} parent=1 // pred_fallthru
      _
    // Predicated region
    $region10: #{tpu_custom_call.1} parent=1 // pred_check
      _
    $region11: #{tpu_custom_call.1} parent=1 // pred_check_branch
      %36 = sbr.rel (0) target = $region13
    $region12: #{tpu_custom_call.1} parent=1 // pred_region
      _
    $region13: #{tpu_custom_call.1} parent=1 // pred_fallthru
      _
    // Predicated region
    $region14: #{tpu_custom_call.1} parent=1 // pred_check
      _
    $region15: #{tpu_custom_call.1} parent=1 // pred_check_branch
      %38 = sbr.rel (0) target = $region17
    $region16: #{tpu_custom_call.1} parent=1 // pred_region
      %39 = dma.done [#allocation4], 128
    $region17: #{tpu_custom_call.1} parent=1 // pred_fallthru
      _
    // Predicated region
    $region18: #{tpu_custom_call.1} parent=1 // pred_check
      _
    $region19: #{tpu_custom_call.1} parent=1 // pred_check_branch
      %41 = sbr.rel (0) target = $region21
    $region20: #{tpu_custom_call.1} parent=1 // pred_region
      %42 = dma.done [#allocation7], 2048
    $region21: #{tpu_custom_call.1} parent=1 // pred_fallthru
      _
    %p43 = scmp.eq.s32.totalorder 0, 0
    // Predicated region
    $region22: #{tpu_custom_call.1} parent=1 // pred_check
      %p44 = pneg %p43
    $region23: #{tpu_custom_call.1} parent=1 // pred_check_branch
      %46 = sbr.rel (%p44) target = $region25
    $region24: #{tpu_custom_call.1} parent=1 // pred_region
      %47 = vst [vmem:[#allocation2] sm:$0x3] 0.0
    $region25: #{tpu_custom_call.1} parent=1 // pred_fallthru
      _
    %v48 = vld [vmem:[#allocation2] sm:$0x3]
    %v49 = vld [vmem:[#allocation3] sm:$0xf]
    %v50 = vld [vmem:[#allocation3 + $0x4] sm:$0xf]
    %v51 = vunpack.c.l.bf16 %v49
    %v52 = vunpack.c.l.bf16 %v50
    %v53 = vrot.slane %v51, 4
    %v54 = vadd.f32 %v51, %v53
    %v55 = vrot.slane %v54, 2
    %v56 = vadd.f32 %v54, %v55
    %v57 = vrot.slane %v56, 1
    %v58 = vadd.f32 %v56, %v57
    %v59 = vrot.slane %v52, 4
    %v60 = vadd.f32 %v52, %v59
    %v61 = vrot.slane %v60, 2
    %v62 = vadd.f32 %v60, %v61
    %v63 = vrot.slane %v62, 1
    %v64 = vadd.f32 %v62, %v63
    %vm67 = vcmask 1041409
    %v68 = vsel %vm67, %v64, %v58
    %v70 = vadd.f32 %v48, %v68
    %71 = vst [vmem:[#allocation2] sm:$0x3] %v70
    // Predicated region
    $region26: #{tpu_custom_call.1} parent=1 // pred_check
      %p72 = pneg %p43
    $region27: #{tpu_custom_call.1} parent=1 // pred_check_branch
      %74 = sbr.rel (%p72) target = $region29
    $region28: #{tpu_custom_call.1} parent=1 // pred_region
      %v75 = vld [vmem:[#allocation2] sm:$0x3]
      %v76 = vld [vmem:[#allocation6] sm:$0xff]
      %v77 = vld [vmem:[#allocation6 + $0x8] sm:$0xff]
      %v78 = vld [vmem:[#allocation6 + $0x10] sm:$0xff]
      %v79 = vld [vmem:[#allocation6 + $0x18] sm:$0xff]
      %v80 = vld [vmem:[#allocation6 + $0x20] sm:$0xff]
      %v81 = vld [vmem:[#allocation6 + $0x28] sm:$0xff]
      %v82 = vld [vmem:[#allocation6 + $0x30] sm:$0xff]
      %v83 = vld [vmem:[#allocation6 + $0x38] sm:$0xff]
      %v84 = vld [vmem:[#allocation6 + $0x40] sm:$0xff]
      %v85 = vld [vmem:[#allocation6 + $0x48] sm:$0xff]
      %v86 = vld [vmem:[#allocation6 + $0x50] sm:$0xff]
      %v87 = vld [vmem:[#allocation6 + $0x58] sm:$0xff]
      %v88 = vld [vmem:[#allocation6 + $0x60] sm:$0xff]
      %v89 = vld [vmem:[#allocation6 + $0x68] sm:$0xff]
      %v90 = vld [vmem:[#allocation6 + $0x70] sm:$0xff]
      %v91 = vld [vmem:[#allocation6 + $0x78] sm:$0xff]
      %v92 = vld [vmem:[%s2] sm:$0x1]
      %v94 = vlaneseq
      %v95 = vshrl.u32 %v94, 7
      %v96 = vsub.s32 0, %v95
      %v97 = vrot.slane %v92, %v96
      %99 = vmatprep.subr.mxu0 0.0
      %100 = vmatpush1.msra.mxu0 %v91
      %101 = vmatprep.subr.mxu0 0.0
      %102 = vmatpush1.msra.mxu0 %v90
      %103 = vmatprep.subr.mxu0 0.0
      %104 = vmatpush1.msra.mxu0 %v89
      %105 = vmatprep.subr.mxu0 0.0
      %106 = vmatpush1.msra.mxu0 %v88
      %107 = vmatprep.subr.mxu0 0.0
      %108 = vmatpush1.msra.mxu0 %v87
      %109 = vmatprep.subr.mxu0 0.0
      %110 = vmatpush1.msra.mxu0 %v86
      %111 = vmatprep.subr.mxu0 0.0
      %112 = vmatpush1.msra.mxu0 %v85
      %113 = vmatprep.subr.mxu0 0.0
      %114 = vmatpush1.msra.mxu0 %v84
      %115 = vmatprep.subr.mxu0 0.0
      %116 = vmatpush1.msra.mxu0 %v83
      %117 = vmatprep.subr.mxu0 0.0
      %118 = vmatpush1.msra.mxu0 %v82
      %119 = vmatprep.subr.mxu0 0.0
      %120 = vmatpush1.msra.mxu0 %v81
      %121 = vmatprep.subr.mxu0 0.0
      %122 = vmatpush1.msra.mxu0 %v80
      %123 = vmatprep.subr.mxu0 0.0
      %124 = vmatpush1.msra.mxu0 %v79
      %125 = vmatprep.subr.mxu0 0.0
      %126 = vmatpush1.msra.mxu0 %v78
      %127 = vmatprep.subr.mxu0 0.0
      %128 = vmatpush1.msra.mxu0 %v77
      %129 = vmatprep.subr.mxu0 0.0
      %130 = vmatpush1.msra.mxu0 %v76
      %131 = vmatprep.subr.mxu0 0.0
      %132 = vmatpush2.msra.mxu0 0.0
      %133 = vmatprep.subr.mxu0 0.0
      %134 = vmatpush2.msra.mxu0 0.0
      %135 = vmatprep.subr.mxu0 0.0
      %136 = vmatpush2.msra.mxu0 0.0
      %137 = vmatprep.subr.mxu0 0.0
      %138 = vmatpush2.msra.mxu0 0.0
      %139 = vmatprep.subr.mxu0 0.0
      %140 = vmatpush2.msra.mxu0 0.0
      %141 = vmatprep.subr.mxu0 0.0
      %142 = vmatpush2.msra.mxu0 0.0
      %143 = vmatprep.subr.mxu0 0.0
      %144 = vmatpush2.msra.mxu0 0.0
      %145 = vmatprep.subr.mxu0 0.0
      %146 = vmatpush2.msra.mxu0 0.0
      %147 = vmatprep.subr.mxu0 0.0
      %148 = vmatpush2.msra.mxu0 0.0
      %149 = vmatprep.subr.mxu0 0.0
      %150 = vmatpush2.msra.mxu0 0.0
      %151 = vmatprep.subr.mxu0 0.0
      %152 = vmatpush2.msra.mxu0 0.0
      %153 = vmatprep.subr.mxu0 0.0
      %154 = vmatpush2.msra.mxu0 0.0
      %155 = vmatprep.subr.mxu0 0.0
      %156 = vmatpush2.msra.mxu0 0.0
      %157 = vmatprep.subr.mxu0 0.0
      %158 = vmatpush2.msra.mxu0 0.0
      %159 = vmatprep.subr.mxu0 0.0
      %160 = vmatpush2.msra.mxu0 0.0
      %161 = vmatprep.subr.mxu0 0.0
      %162 = vmatpush2.msra.mxu0 0.0
      %163 = vmatprep.mubr.f32.mxu0 0.0
      %164 = vmatmul.mubr.f32.gmra.mxu0 %v75
      %v165 = vpop.f32.mrf.mxu0
      %v166 = vadd.f32 %v97, %v165
      %v167 = vpop.f32.mrf.mxu0
      %168 = vdwg.mxu0
      %vm169 = vcmask 1041408
      %v170 = vsel %vm169, %v166, -inf
      %171 = vmax.xlane.f32.xlu0 %v170
      %v172 = vpop.xlane.xlu0 %171
      %v173 = vsub.f32 %v166, %v172
      %v174 = vmul.f32 %v173, 1.442695
      %v175 = vpow.pop %v174
      %v176 = vsel %vm169, %v175, 0.0
      %177 = vadd.xlane.f32.xlu0 %v176
      %v178 = vpop.xlane.xlu0 %177
      %v179 = vlog2.pop %v178
      %v180 = vmul.f32 %v179, 0.6931472
      %v181 = vsub.f32 %v173, %v180
      %182 = vst [vmem:[#allocation8] sm:$0x3] %v181
    $region29: #{tpu_custom_call.1} parent=1 // pred_fallthru
      _
    // Predicated region
    $region30: #{tpu_custom_call.1} parent=1 // pred_check
      _
    $region31: #{tpu_custom_call.1} parent=1 // pred_check_branch
      %184 = sbr.rel (0) target = $region33
    $region32: #{tpu_custom_call.1} parent=1 // pred_region
      %s186 = ssub.s32 32, 32
      %187 = vsyncadd [#allocation5], %s186
      %s189 = sshll.u32 [#allocation8], 4
      %s190 = int_to_ptr.vmem [resolvable:$true] %s189
      %192 = dma.vmem_to_hbm [thread:$0]  %s190, 32, %s3, [#allocation5]
    $region33: #{tpu_custom_call.1} parent=1 // pred_fallthru
      _
    // Predicated region
    $region34: #{tpu_custom_call.1} parent=1 // pred_check
      _
    $region35: #{tpu_custom_call.1} parent=1 // pred_check_branch
      %194 = sbr.rel (0) target = $region37
    $region36: #{tpu_custom_call.1} parent=1 // pred_region
      %195 = dma.done [#allocation5], 32
    $region37: #{tpu_custom_call.1} parent=1 // pred_fallthru
      _
    %196 = vsyncpa [#allocation4], 1
    %197 = vsyncpa [#allocation7], 1
    %198 = vsyncpa [#allocation5], 1

</llo_original>
